<compile_context>
chip_gen: v6e
topology: v6e:2x2x1
jax: 0.10.0
libtpu: 0.0.40
codegen_flags: <defaults>
</compile_context>

<pallas_src>
import jax
import jax.numpy as jnp
from jax.experimental import pallas as pl
from jax.experimental.pallas import tpu as pltpu


def attention_kernel(qv_ref, v_ref, w12_ref, b12_ref, vw_ref, vb_ref, out_ref):
    # qv_ref : [TB*S, 2H] bf16   (query | value concatenated on the hidden axis)
    # v_ref  : [TB, S, H] f32    (value, f32 for the exact sequence sum)
    # w12_ref: [2H, H]    bf16   (W1^T stacked on W2^T)
    # b12_ref: [1, H]     f32    (b1 + b2)
    # vw_ref : [1, H]     f32    (V weight, lane-dense)
    # vb_ref : [1, 1]     f32    (V bias)
    # out_ref: [TB, H]    f32
    TB, S, H = v_ref.shape

    # Fused projection: tanh(q @ W1^T + v @ W2^T + b1 + b2) as ONE MXU matmul over
    # the 2H contraction (bf16 inputs, f32 accumulate), tanh/softmax stay in f32.
    t = jnp.tanh(
        jnp.dot(qv_ref[...], w12_ref[...], preferred_element_type=jnp.float32)
        + b12_ref[...])                                            # [TB*S, H] f32

    # score = t @ V + b_V via VPU multiply + cross-lane reduce (XLU); an N=1 MXU
    # matmul would use ~1% of the systolic array.
    score = jnp.sum(t * vw_ref[...], axis=-1, keepdims=True) + vb_ref[...]  # [TB*S, 1]
    score = score.reshape(TB, S, 1)

    # Softmax over the sequence axis (torch axis=1 of [B, S, 1]).
    m = jnp.max(score, axis=1, keepdims=True)                      # [TB, 1, 1]
    p = jnp.exp(score - m)                                         # [TB, S, 1]
    psum = jnp.sum(p, axis=1, keepdims=True)                       # [TB, 1, 1]
    # sum_s softmax(score)[s] (== 1 up to rounding) -- the only part of the attention
    # weights that survives the final seq reduction of (att + value).
    att_seq_sum = psum * pl.reciprocal(psum, approx=False)         # [TB, 1, 1]

    # sum_s (att + value) = sum_s value + sum_s att : no [S, H] ctx temporary.
    vsum = jnp.sum(v_ref[...], axis=1)                             # [TB, H] f32
    out_ref[...] = vsum + att_seq_sum[:, 0, :]                     # [TB, H]


def attention_forward(query, value, params, *, tb=16):
    """query, value: [B, S, H] float32.  Returns [B, H] float32."""
    B, S, H = query.shape
    w1_t, b1, w2_t, b2, v_w, v_b = params      # w*_t: [H, H] (in, out); v_w: [H, 1]

    tb = max(1, min(tb, B))
    n_tiles = pl.cdiv(B, tb)
    B_pad = n_tiles * tb
    if B_pad != B:
        pad = ((0, B_pad - B), (0, 0), (0, 0))
        query = jnp.pad(query, pad)
        value = jnp.pad(value, pad)

    # Fuse the two projections: concat hidden axes / stack weights / pre-add biases.
    qv = jnp.concatenate([query, value], axis=-1).astype(jnp.bfloat16)   # [B_pad, S, 2H]
    qv = qv.reshape(B_pad * S, 2 * H)                                    # flat, lane-dense
    w12 = jnp.concatenate([w1_t, w2_t], axis=0).astype(jnp.bfloat16)     # [2H, H]
    b12 = (b1 + b2).reshape(1, H).astype(jnp.float32)
    vw = v_w.reshape(1, H).astype(jnp.float32)                           # [H,1] -> [1,H]
    vb = v_b.reshape(1, 1).astype(jnp.float32)
    val = value.astype(jnp.float32)

    cost = pl.CostEstimate(
        flops=2 * B_pad * S * (2 * H) * H + 8 * B_pad * S * H,
        transcendentals=B_pad * S * (H + 1),
        bytes_accessed=qv.size * 2 + val.size * 4 + w12.size * 2
        + (b12.size + vw.size + vb.size + B_pad * H) * 4,
    )

    out = pl.pallas_call(
        attention_kernel,
        out_shape=jax.ShapeDtypeStruct((B_pad, H), jnp.float32),
        grid_spec=pltpu.PrefetchScalarGridSpec(
            num_scalar_prefetch=0,
            grid=(n_tiles,),
            in_specs=[
                pl.BlockSpec((tb * S, 2 * H), lambda i: (i, 0)),   # qv (bf16)
                pl.BlockSpec((tb, S, H), lambda i: (i, 0, 0)),     # value (f32)
                pl.BlockSpec((2 * H, H), lambda i: (0, 0)),        # W12^T (resident)
                pl.BlockSpec((1, H), lambda i: (0, 0)),            # b1 + b2
                pl.BlockSpec((1, H), lambda i: (0, 0)),            # V weight
                pl.BlockSpec((1, 1), lambda i: (0, 0)),            # V bias
            ],
            out_specs=pl.BlockSpec((tb, H), lambda i: (i, 0)),
        ),
        compiler_params=pltpu.CompilerParams(
            dimension_semantics=("parallel",),
            vmem_limit_bytes=32 * 1024 * 1024,
        ),
        cost_estimate=cost,
    )(qv, val, w12, b12, vw, vb)
    return out[:B]                                                  # [B, H]


def init_params(key, hidden_size):
    """Deterministic init mimicking torch.nn.Linear defaults (uniform +/- 1/sqrt(fan_in))."""
    ks = jax.random.split(key, 6)
    bound = 1.0 / jnp.sqrt(hidden_size)
    # stored directly as [in, out] (transposed relative to torch's [out, in])
    w1_t = jax.random.uniform(ks[0], (hidden_size, hidden_size), jnp.float32, -bound, bound)
    b1 = jax.random.uniform(ks[1], (hidden_size,), jnp.float32, -bound, bound)
    w2_t = jax.random.uniform(ks[2], (hidden_size, hidden_size), jnp.float32, -bound, bound)
    b2 = jax.random.uniform(ks[3], (hidden_size,), jnp.float32, -bound, bound)
    v_w = jax.random.uniform(ks[4], (hidden_size, 1), jnp.float32, -bound, bound)
    v_b = jax.random.uniform(ks[5], (1,), jnp.float32, -bound, bound)
    return (w1_t, b1, w2_t, b2, v_w, v_b)


def attention_reference(query, value, params):
    """Pure-JAX reference matching the PyTorch forward exactly."""
    w1_t, b1, w2_t, b2, v_w, v_b = params
    score = jnp.tanh(query @ w1_t + b1 + value @ w2_t + b2) @ v_w + v_b   # [B, S, 1]
    att = jax.nn.softmax(score, axis=1)                                   # [B, S, 1]
    ctx = att + value                                                     # [B, S, H]
    return jnp.sum(ctx, axis=1)                                           # [B, H]


if __name__ == "__main__":
    # NOTE: the reference module computes att + value (not att * value), so the
    # attention weights only contribute their softmax column-sum (== 1) to the
    # output; kept faithfully.  # TODO(synk): confirm with author (likely att * value).
    B, S, H = 2, 8, 32
    key = jax.random.PRNGKey(0)
    k_q, k_v, k_p = jax.random.split(key, 3)

    query = jax.random.normal(k_q, (B, S, H), jnp.float32)
    value = jax.random.normal(k_v, (B, S, H), jnp.float32)
    params = init_params(k_p, H)

    out = attention_forward(query, value, params)
    out = jax.block_until_ready(out)

    ref = attention_reference(query, value, params)
    assert out.shape == (B, H)
    assert jnp.allclose(out, ref, atol=1e-5, rtol=1e-5), "mismatch vs reference"

    print("KERNEL_OK")
</pallas_src>

<mosaic_0001>
module attributes {stable_mosaic.version = 11 : i64} {
  func.func @attention_kernel(%arg0: i32, %arg1: memref<16x64xbf16, #tpu.memory_space<vmem>>, %arg2: memref<2x8x32xf32, #tpu.memory_space<vmem>>, %arg3: memref<64x32xbf16, #tpu.memory_space<vmem>>, %arg4: memref<1x32xf32, #tpu.memory_space<vmem>>, %arg5: memref<1x32xf32, #tpu.memory_space<vmem>>, %arg6: memref<1x1xf32, #tpu.memory_space<vmem>>, %arg7: memref<2x32xf32, #tpu.memory_space<vmem>>) attributes {dimension_semantics = [#tpu.dimension_semantics<parallel>], iteration_bounds = array<i64: 1>, scalar_prefetch = 0 : i64, scratch_operands = 0 : i64, tpu.core_type = #tpu.core_type<tc>, window_params = [{transform_indices = @transform_0, window_bounds = array<i64: 16, 64>}, {transform_indices = @transform_1, window_bounds = array<i64: 2, 8, 32>}, {pipeline_mode = #tpu.pipeline_mode<synchronous>, transform_indices = @transform_2, window_bounds = array<i64: 64, 32>}, {pipeline_mode = #tpu.pipeline_mode<synchronous>, transform_indices = @transform_3, window_bounds = array<i64: 1, 32>}, {pipeline_mode = #tpu.pipeline_mode<synchronous>, transform_indices = @transform_4, window_bounds = array<i64: 1, 32>}, {pipeline_mode = #tpu.pipeline_mode<synchronous>, transform_indices = @transform_5, window_bounds = array<i64: 1, 1>}, {transform_indices = @transform_6, window_bounds = array<i64: 2, 32>}]} {
    %c0 = arith.constant 0 : index
    %c0_0 = arith.constant 0 : index
    %0 = vector.load %arg1[%c0, %c0_0] : memref<16x64xbf16, #tpu.memory_space<vmem>>, vector<16x64xbf16>
    %c0_1 = arith.constant 0 : index
    %c0_2 = arith.constant 0 : index
    %1 = vector.load %arg3[%c0_1, %c0_2] : memref<64x32xbf16, #tpu.memory_space<vmem>>, vector<64x32xbf16>
    %cst = arith.constant dense<0.000000e+00> : vector<16x32xf32>
    %2 = tpu.matmul %0, %1, %cst {dimension_numbers = #tpu.dot_dimension_numbers<[1], [0], [0], [1], [0, 0, 1, 1], [], []>} : vector<16x64xbf16>, vector<64x32xbf16>, vector<16x32xf32> -> vector<16x32xf32>
    %c0_3 = arith.constant 0 : index
    %c0_4 = arith.constant 0 : index
    %3 = vector.load %arg4[%c0_3, %c0_4] : memref<1x32xf32, #tpu.memory_space<vmem>>, vector<1x32xf32>
    %4 = vector.broadcast %3 : vector<1x32xf32> to vector<16x32xf32>
    %5 = arith.addf %2, %4 : vector<16x32xf32>
    %6 = math.tanh %5 : vector<16x32xf32>
    %c0_5 = arith.constant 0 : index
    %c0_6 = arith.constant 0 : index
    %7 = vector.load %arg5[%c0_5, %c0_6] : memref<1x32xf32, #tpu.memory_space<vmem>>, vector<1x32xf32>
    %8 = vector.broadcast %7 : vector<1x32xf32> to vector<16x32xf32>
    %9 = arith.mulf %6, %8 : vector<16x32xf32>
    %cst_7 = arith.constant dense<0.000000e+00> : vector<16xf32>
    %10 = vector.multi_reduction <add>, %9, %cst_7 [1] : vector<16x32xf32> to vector<16xf32>
    %11 = vector.shape_cast %10 : vector<16xf32> to vector<16x1xf32>
    %c0_8 = arith.constant 0 : index
    %c0_9 = arith.constant 0 : index
    %12 = vector.load %arg6[%c0_8, %c0_9] : memref<1x1xf32, #tpu.memory_space<vmem>>, vector<1x1xf32>
    %13 = vector.broadcast %12 : vector<1x1xf32> to vector<16x1xf32>
    %14 = arith.addf %11, %13 : vector<16x1xf32>
    %15 = vector.shape_cast %14 : vector<16x1xf32> to vector<2x8x1xf32>
    %cst_10 = arith.constant dense<0xFF800000> : vector<2x1xf32>
    %16 = vector.multi_reduction <maximumf>, %15, %cst_10 [1] : vector<2x8x1xf32> to vector<2x1xf32>
    %17 = vector.shape_cast %16 : vector<2x1xf32> to vector<2x1x1xf32>
    %18 = vector.broadcast %17 : vector<2x1x1xf32> to vector<2x8x1xf32>
    %19 = arith.subf %15, %18 : vector<2x8x1xf32>
    %20 = math.exp %19 : vector<2x8x1xf32>
    %cst_11 = arith.constant dense<0.000000e+00> : vector<2x1xf32>
    %21 = vector.multi_reduction <add>, %20, %cst_11 [1] : vector<2x8x1xf32> to vector<2x1xf32>
    %22 = vector.shape_cast %21 : vector<2x1xf32> to vector<2x1x1xf32>
    %23 = tpu.reciprocal %22 : vector<2x1x1xf32> -> vector<2x1x1xf32>
    %24 = arith.mulf %22, %23 : vector<2x1x1xf32>
    %c0_12 = arith.constant 0 : index
    %c0_13 = arith.constant 0 : index
    %c0_14 = arith.constant 0 : index
    %25 = vector.load %arg2[%c0_12, %c0_13, %c0_14] : memref<2x8x32xf32, #tpu.memory_space<vmem>>, vector<2x8x32xf32>
    %cst_15 = arith.constant dense<0.000000e+00> : vector<2x32xf32>
    %26 = vector.multi_reduction <add>, %25, %cst_15 [1] : vector<2x8x32xf32> to vector<2x32xf32>
    %27 = vector.shape_cast %24 : vector<2x1x1xf32> to vector<2x1xf32>
    %28 = vector.broadcast %27 : vector<2x1xf32> to vector<2x32xf32>
    %29 = arith.addf %26, %28 : vector<2x32xf32>
    %c0_16 = arith.constant 0 : index
    %c0_17 = arith.constant 0 : index
    %30 = vector.load %arg7[%c0_16, %c0_17] : memref<2x32xf32, #tpu.memory_space<vmem>>, vector<2x32xf32>
    tpu.vector_store %arg7[%c0_16, %c0_17], %29 {strides = array<i32>} : memref<2x32xf32, #tpu.memory_space<vmem>>, vector<2x32xf32>,
    return
  }
  func.func @transform_0(%arg0: i32) -> (i32, i32) {
    %c0_i32 = arith.constant 0 : i32
    %c0_i32_0 = arith.constant 0 : i32
    return %arg0, %c0_i32 : i32, i32
  }
  func.func @transform_1(%arg0: i32) -> (i32, i32, i32) {
    %c0_i32 = arith.constant 0 : i32
    %c0_i32_0 = arith.constant 0 : i32
    %c0_i32_1 = arith.constant 0 : i32
    return %arg0, %c0_i32, %c0_i32_0 : i32, i32, i32
  }
  func.func @transform_2(%arg0: i32) -> (i32, i32) {
    %c0_i32 = arith.constant 0 : i32
    %c0_i32_0 = arith.constant 0 : i32
    %c0_i32_1 = arith.constant 0 : i32
    return %c0_i32, %c0_i32_0 : i32, i32
  }
  func.func @transform_3(%arg0: i32) -> (i32, i32) {
    %c0_i32 = arith.constant 0 : i32
    %c0_i32_0 = arith.constant 0 : i32
    %c0_i32_1 = arith.constant 0 : i32
    return %c0_i32, %c0_i32_0 : i32, i32
  }
  func.func @transform_4(%arg0: i32) -> (i32, i32) {
    %c0_i32 = arith.constant 0 : i32
    %c0_i32_0 = arith.constant 0 : i32
    %c0_i32_1 = arith.constant 0 : i32
    return %c0_i32, %c0_i32_0 : i32, i32
  }
  func.func @transform_5(%arg0: i32) -> (i32, i32) {
    %c0_i32 = arith.constant 0 : i32
    %c0_i32_0 = arith.constant 0 : i32
    %c0_i32_1 = arith.constant 0 : i32
    return %c0_i32, %c0_i32_0 : i32, i32
  }
  func.func @transform_6(%arg0: i32) -> (i32, i32) {
    %c0_i32 = arith.constant 0 : i32
    %c0_i32_0 = arith.constant 0 : i32
    return %arg0, %c0_i32 : i32, i32
  }
}

</mosaic_0001>

<llo_original>
// kernel: tpu_custom_call.1
$region0: #{tpu_custom_call.1}
  #allocation0 [shape = 'u32[]', space=smem, size = 0x4, offset = 0x4, fixed_abs, tag = 'smem constant byte address 0x4 - core index']
  #allocation1 [shape = 'u32[144,128]{1,0:T(1,128)}', space=vmem, size = 0x12000, scoped, tag = 'internal scratch']
  #allocation2 [shape = 'f32[1,1]{1,0:T(1,128)S(1)}', space=vmem, size = 0x200, scoped, tag = 'scoped memory for tpu_custom_call.1']
  %s0 = inlined_call_operand.vmem [shape: bf16[16,64], index: 0, kind: input, shape index: {}]
  %s1 = inlined_call_operand.vmem [shape: f32[2,8,32], index: 1, kind: input, shape index: {}]
  %s2 = inlined_call_operand.vmem [shape: bf16[64,32], index: 2, kind: input, shape index: {}]
  %s3 = inlined_call_operand.vmem [shape: f32[1,32], index: 3, kind: input, shape index: {}]
  %s4 = inlined_call_operand.vmem [shape: f32[1,32], index: 4, kind: input, shape index: {}]
  %s5 = inlined_call_operand.<no memory space> [shape: f32[1,1], index: 5, kind: input, shape index: {}]
  %s6 = inlined_call_operand.hbm [shape: f32[2,32], index: 6, kind: output, shape index: {}]
  %s7 = sld [smem:[#allocation0]]
  $region34: #{tpu_custom_call.1} parent=0
    _
  %s9 = ssub.s32 1, %s7
  %s10 = scalar_select 0, %s9, %s7
  %v11 = vstv %s5
  %12 = vst [vmem:[#allocation2] sm:$0x1] %v11
  $region1: #{tpu_custom_call.1} parent=0
    #allocation3 [shape = 'u8[1024]{0}', space=vmem, size = 0x400, scoped, tag = 'output window, operand 0, single buffered']
    #allocation4 [shape = 's32[1]{0}', space=sflag, size = 0x4, scoped, tag = 'scoped memory for tpu_custom_call.1']
    %13 = vsyncpa [#allocation4], 0
    // Predicated region
    $region2: #{tpu_custom_call.1} parent=1 // pred_check
      _
    $region3: #{tpu_custom_call.1} parent=1 // pred_check_branch
      %15 = sbr.rel (0) target = $region5
    $region4: #{tpu_custom_call.1} parent=1 // pred_region
      _
    $region5: #{tpu_custom_call.1} parent=1 // pred_fallthru
      _
    // Predicated region
    $region6: #{tpu_custom_call.1} parent=1 // pred_check
      _
    $region7: #{tpu_custom_call.1} parent=1 // pred_check_branch
      %17 = sbr.rel (0) target = $region9
    $region8: #{tpu_custom_call.1} parent=1 // pred_region
      _
    $region9: #{tpu_custom_call.1} parent=1 // pred_fallthru
      _
    // Predicated region
    $region10: #{tpu_custom_call.1} parent=1 // pred_check
      _
    $region11: #{tpu_custom_call.1} parent=1 // pred_check_branch
      %19 = sbr.rel (0) target = $region13
    $region12: #{tpu_custom_call.1} parent=1 // pred_region
      _
    $region13: #{tpu_custom_call.1} parent=1 // pred_fallthru
      _
    // Predicated region
    $region14: #{tpu_custom_call.1} parent=1 // pred_check
      _
    $region15: #{tpu_custom_call.1} parent=1 // pred_check_branch
      %21 = sbr.rel (0) target = $region17
    $region16: #{tpu_custom_call.1} parent=1 // pred_region
      _
    $region17: #{tpu_custom_call.1} parent=1 // pred_fallthru
      _
    // Predicated region
    $region18: #{tpu_custom_call.1} parent=1 // pred_check
      _
    $region19: #{tpu_custom_call.1} parent=1 // pred_check_branch
      %23 = sbr.rel (0) target = $region21
    $region20: #{tpu_custom_call.1} parent=1 // pred_region
      _
    $region21: #{tpu_custom_call.1} parent=1 // pred_fallthru
      _
    // Predicated region
    $region22: #{tpu_custom_call.1} parent=1 // pred_check
      _
    $region23: #{tpu_custom_call.1} parent=1 // pred_check_branch
      %25 = sbr.rel (0) target = $region25
    $region24: #{tpu_custom_call.1} parent=1 // pred_region
      _
    $region25: #{tpu_custom_call.1} parent=1 // pred_fallthru
      _
    %v27 = vld [vmem:[%s0] sm:$0xf]
    %v28 = vld [vmem:[%s0 + $0x4] sm:$0xf]
    %v29 = vld [vmem:[%s2] sm:$0xf]
    %v30 = vld [vmem:[%s2 + $0x4] sm:$0xf]
    %v31 = vld [vmem:[%s2 + $0x8] sm:$0xf]
    %v32 = vld [vmem:[%s2 + $0xc] sm:$0xf]
    %v33 = vld [vmem:[%s2 + $0x10] sm:$0xf]
    %v34 = vld [vmem:[%s2 + $0x14] sm:$0xf]
    %v35 = vld [vmem:[%s2 + $0x18] sm:$0xf]
    %v36 = vld [vmem:[%s2 + $0x1c] sm:$0xf]
    %v37 = vld [vmem:[%s3] sm:$0x1]
    %v39 = vlaneseq
    %v40 = vshrl.u32 %v39, 7
    %v41 = vsub.s32 0, %v40
    %v42 = vrot.slane %v37, %v41
    %v46 = vunpack.c.l.b16 %v27
    %v47 = vunpack.c.l.b16 %v28
    %v48 = vpack.c.b16 %v47, %v46
    %v57 = vunpack.c.l.b16 %v29
    %v58 = vunpack.c.l.b16 %v30
    %v59 = vunpack.c.l.b16 %v31
    %v60 = vunpack.c.l.b16 %v32
    %v61 = vunpack.c.l.b16 %v33
    %v62 = vunpack.c.l.b16 %v34
    %v63 = vunpack.c.l.b16 %v35
    %v64 = vunpack.c.l.b16 %v36
    %v65 = vpack.c.b16 %v58, %v57
    %v66 = vpack.c.b16 %v60, %v59
    %v67 = vpack.c.b16 %v62, %v61
    %v68 = vpack.c.b16 %v64, %v63
    %vm73 = vcmask 523264
    %v75 = vsel %vm73, %v48, 0
    %77 = vmatprep.subr.bf16.mxu0 0
    %78 = vmatpush1.bf16.msra.mxu0 0
    %79 = vmatprep.subr.bf16.mxu0 0
    %80 = vmatpush1.bf16.msra.mxu0 0
    %81 = vmatprep.subr.bf16.mxu0 0
    %82 = vmatpush1.bf16.msra.mxu0 0
    %83 = vmatprep.subr.bf16.mxu0 0
    %84 = vmatpush1.bf16.msra.mxu0 0
    %85 = vmatprep.subr.bf16.mxu0 0
    %86 = vmatpush1.bf16.msra.mxu0 %v68
    %87 = vmatprep.subr.bf16.mxu0 0
    %88 = vmatpush1.bf16.msra.mxu0 %v67
    %89 = vmatprep.subr.bf16.mxu0 0
    %90 = vmatpush1.bf16.msra.mxu0 %v66
    %91 = vmatprep.subr.bf16.mxu0 0
    %92 = vmatpush1.bf16.msra.mxu0 %v65
    %93 = vmatprep.subr.bf16.mxu0 0
    %94 = vmatpush2.bf16.msra.mxu0 0
    %95 = vmatprep.subr.bf16.mxu0 0
    %96 = vmatpush2.bf16.msra.mxu0 0
    %97 = vmatprep.subr.bf16.mxu0 0
    %98 = vmatpush2.bf16.msra.mxu0 0
    %99 = vmatprep.subr.bf16.mxu0 0
    %100 = vmatpush2.bf16.msra.mxu0 0
    %101 = vmatprep.subr.bf16.mxu0 0
    %102 = vmatpush2.bf16.msra.mxu0 0
    %103 = vmatprep.subr.bf16.mxu0 0
    %104 = vmatpush2.bf16.msra.mxu0 0
    %105 = vmatprep.subr.bf16.mxu0 0
    %106 = vmatpush2.bf16.msra.mxu0 0
    %107 = vmatprep.subr.bf16.mxu0 0
    %108 = vmatpush2.bf16.msra.mxu0 0
    %109 = vmatprep.mubr.bf16.mxu0 0
    %110 = vmatmul.mubr.bf16.gmra.mxu0 %v75
    %v111 = vpop.f32.mrf.mxu0
    %v112 = vadd.f32 %v42, %v111
    %v113 = vpop.f32.mrf.mxu0
    %v114 = vpop.f32.mrf.mxu0
    %v115 = vadd.f32 %v42, %v114
    %v116 = vpop.f32.mrf.mxu0
    %117 = vdwg.mxu0
    %v118 = vtanh.pop %v112
    %v119 = vtanh.pop %v115
    %v120 = vld [vmem:[%s4] sm:$0x1]
    %v122 = vlaneseq
    %v123 = vshrl.u32 %v122, 7
    %v124 = vsub.s32 0, %v123
    %v125 = vrot.slane %v120, %v124
    %v127 = vmul.f32 %v118, %v125
    %v128 = vmul.f32 %v119, %v125
    %vm129 = vcmask 261120
    %v130 = vsel %vm129, %v127, 0.0
    %131 = vadd.xlane.f32.xlu0 %v130
    %v132 = vpop.xlane.xlu0 %131
    %v133 = vsel %vm129, %v128, 0.0
    %134 = vadd.xlane.f32.xlu0 %v133
    %v135 = vpop.xlane.xlu0 %134
    %v136 = vld [vmem:[#allocation2] sm:$0x1]
    %v138 = vlaneseq
    %v139 = vshrl.u32 %v138, 7
    %v140 = vsub.s32 0, %v139
    %v141 = vrot.slane %v136, %v140
    %v143 = vadd.f32 %v132, %v141
    %v144 = vadd.f32 %v135, %v141
    %vm145 = vcmask 7168
    %v146 = vsel %vm145, %v143, -inf
    %v147 = vrot.slane %v146, 4
    %v148 = vmax.f32 %v146, %v147
    %v149 = vrot.slane %v148, 2
    %v150 = vmax.f32 %v148, %v149
    %v151 = vrot.slane %v150, 1
    %v152 = vmax.f32 %v150, %v151
    %v153 = vsel %vm145, %v144, -inf
    %v154 = vrot.slane %v153, 4
    %v155 = vmax.f32 %v153, %v154
    %v156 = vrot.slane %v155, 2
    %v157 = vmax.f32 %v155, %v156
    %v158 = vrot.slane %v157, 1
    %v159 = vmax.f32 %v157, %v158
    %v160 = vsub.f32 %v143, %v152
    %v161 = vsub.f32 %v144, %v159
    %v162 = vmul.f32 %v160, 1.442695
    %v163 = vpow.pop %v162
    %v164 = vmul.f32 %v161, 1.442695
    %v165 = vpow.pop %v164
    %v166 = vsel %vm145, %v163, 0.0
    %v167 = vrot.slane %v166, 4
    %v168 = vadd.f32 %v166, %v167
    %v169 = vrot.slane %v168, 2
    %v170 = vadd.f32 %v168, %v169
    %v171 = vrot.slane %v170, 1
    %v172 = vadd.f32 %v170, %v171
    %v173 = vsel %vm145, %v165, 0.0
    %v174 = vrot.slane %v173, 4
    %v175 = vadd.f32 %v173, %v174
    %v176 = vrot.slane %v175, 2
    %v177 = vadd.f32 %v175, %v176
    %v178 = vrot.slane %v177, 1
    %v179 = vadd.f32 %v177, %v178
    %v180 = vrcp.pop %v172
    %v181 = vrcp.pop %v179
    %v182 = vmul.f32 %v172, %v180
    %v183 = vmul.f32 %v179, %v181
    %v184 = vld [vmem:[%s1] sm:$0xff]
    %v185 = vld [vmem:[%s1 + $0x8] sm:$0xff]
    %v186 = vsel %vm129, %v184, 0.0
    %v187 = vrot.slane %v186, 4
    %v188 = vadd.f32 %v186, %v187
    %v189 = vrot.slane %v188, 2
    %v190 = vadd.f32 %v188, %v189
    %v191 = vrot.slane %v190, 1
    %v192 = vadd.f32 %v190, %v191
    %v193 = vsel %vm129, %v185, 0.0
    %v194 = vrot.slane %v193, 4
    %v195 = vadd.f32 %v193, %v194
    %v196 = vrot.slane %v195, 2
    %v197 = vadd.f32 %v195, %v196
    %v198 = vrot.slane %v197, 1
    %v199 = vadd.f32 %v197, %v198
    %201 = vset.pattern.permute.xlu0 0
    %202 = vperm.xlu0 %201, %v182
    %v203 = vpop.permute.xlu0 %202
    %206 = vset.pattern.permute.xlu0 0
    %207 = vperm.xlu0 %206, %v183
    %v208 = vpop.permute.xlu0 %207
    %v210 = vadd.f32 %v192, %v203
    %v211 = vadd.f32 %v199, %v208
    %vm214 = vcmask 1041409
    %v215 = vsel %vm214, %v211, %v210
    %vm217 = vcmask 254976
    %218 = vst.msk [vmem:[#allocation3] sm:$0x3] %vm217, %v215
    // Predicated region
    $region26: #{tpu_custom_call.1} parent=1 // pred_check
      _
    $region27: #{tpu_custom_call.1} parent=1 // pred_check_branch
      %220 = sbr.rel (0) target = $region29
    $region28: #{tpu_custom_call.1} parent=1 // pred_region
      %s222 = ssub.s32 32, 32
      %223 = vsyncadd [#allocation4], %s222
      %s225 = sshll.u32 [#allocation3], 4
      %s226 = int_to_ptr.vmem [resolvable:$true] %s225
      %228 = dma.vmem_to_hbm [thread:$0]  %s226, 32, %s6, [#allocation4]
    $region29: #{tpu_custom_call.1} parent=1 // pred_fallthru
      _
    // Predicated region
    $region30: #{tpu_custom_call.1} parent=1 // pred_check
      _
    $region31: #{tpu_custom_call.1} parent=1 // pred_check_branch
      %230 = sbr.rel (0) target = $region33
    $region32: #{tpu_custom_call.1} parent=1 // pred_region
      %231 = dma.done [#allocation4], 32
    $region33: #{tpu_custom_call.1} parent=1 // pred_fallthru
      _
    %232 = vsyncpa [#allocation4], 1

</llo_original>
